<compile_context>
chip_gen: v6e
topology: v6e:2x2x1
jax: 0.10.0
libtpu: 0.0.40
codegen_flags: <defaults>
</compile_context>

<pallas_src>
import jax
import jax.numpy as jnp
from jax.experimental import pallas as pl
from jax.experimental.pallas import tpu as pltpu


def tcnn_kernel(x_ref, w3_ref, bc_ref, wf_ref, bf_ref, out_ref):
    # x_ref  : (TB, L, Cin)   float32 activation tile (kept in f32; cast only at the MXU operand)
    # w3_ref : (Cin, 3*H)     conv weight, column block k*H:(k+1)*H is tap k, compute dtype
    # bc_ref : (1, H)         conv bias, f32
    # wf_ref : (H, Nout)      fc weight with 1/L pool scale folded in, lane-padded, compute dtype
    # bf_ref : (1, Nout)      fc bias (lane-padded), f32
    # out_ref: (TB, Nout)
    TB, L, Cin = x_ref.shape
    H = bc_ref.shape[-1]

    x = x_ref[...]                                                    # f32, resident tile

    # One MXU push per tile: per-tap projections y_k[l] = x[l] @ w_k for k = 0..2.
    # Operand is just the resident x tile reshaped (no im2col concatenates); N = 3*H is lane-dense.
    y = jnp.dot(x.reshape(TB * L, Cin).astype(w3_ref.dtype), w3_ref[...],
                preferred_element_type=jnp.float32).reshape(TB, L, 3 * H)

    # padding=1 handled on the (lane-dense, H-wide) conv outputs:
    #   conv[l] = y0[l-1] + y1[l] + y2[l+1], boundary rows zero.
    zrow = jnp.zeros((TB, 1, H), jnp.float32)
    left = jnp.concatenate([zrow, y[:, :L - 1, 0:H]], axis=1)          # tap k=0 shifted to l+1
    right = jnp.concatenate([y[:, 1:, 2 * H:3 * H], zrow], axis=1)     # tap k=2 shifted to l-1

    conv = jnp.maximum(y[:, :, H:2 * H] + left + right + bc_ref[...], 0.0)   # bias + ReLU, f32 VPU

    # AdaptiveAvgPool1d(1): sum over time; the 1/L scale is folded into wf in the wrapper.
    pooled = jnp.sum(conv, axis=1)                                     # (TB, H) f32

    out = jnp.dot(pooled.astype(wf_ref.dtype), wf_ref[...],
                  preferred_element_type=jnp.float32) + bf_ref[...]    # (TB, Nout)
    out_ref[...] = out.astype(out_ref.dtype)


def _largest_divisor_leq(n, cap):
    cap = max(1, min(cap, n))
    for d in range(cap, 0, -1):
        if n % d == 0:
            return d
    return 1


def _pick_block_b(B, L, Cin, H, *, megacore=False, vmem_step_budget=12 * 1024 * 1024):
    """Per-grid-step batch block.

    VMEM model accounts for the (8,128) tiling: every row of width Cin / H / 3H occupies full
    128-lane vregs, L pads up to a multiple of 8 sublanes, and the x input block is
    double-buffered by the pipeline.  TB is always a divisor of B so no batch padding is needed.
    """
    lanes = lambda n: (-(-n // 128)) * 128
    Lp = (-(-L // 8)) * 8
    per_batch = 4 * Lp * (2 * lanes(Cin)      # f32 x block, double-buffered
                          + lanes(3 * H)      # per-tap matmul result, f32
                          + 3 * lanes(H))     # conv + shifted-tap temporaries, f32
    cap = max(1, min(vmem_step_budget // max(per_batch, 1), 512, B))
    tb = _largest_divisor_leq(B, cap)
    if megacore:
        # v7x: 2 TensorCores share the "parallel" grid axis -> prefer an even, >=2-step grid.
        even = [d for d in range(1, cap + 1) if B % d == 0 and (B // d) >= 2 and (B // d) % 2 == 0]
        if even:
            return max(even)
        multi = [d for d in range(1, cap + 1) if B % d == 0 and (B // d) >= 2]
        if multi:
            return max(multi)
    return tb


def tcnn_forward(x, params, *, block_b=None, compute_dtype=jnp.float32, megacore=False):
    """x: (B, L, in_sz) float32 — the tensor PyTorch's forward receives (pre-transpose).

    params = (conv_w (64, in_sz, 3), conv_b (64,), fc_w (out_w, 64), fc_b (out_w,)),
    i.e. the PyTorch parameter layouts.  On v5e keep compute_dtype=f32; bf16 is the
    v6e/v7x matmul-operand path (activation stays f32 in HBM either way).
    """
    conv_w, conv_b, fc_w, fc_b = params
    B, L, Cin = x.shape
    H = conv_w.shape[0]
    out_w = fc_w.shape[0]

    # Conv weight (H, Cin, 3) -> (Cin, 3, H) -> (Cin, 3*H); column block k pairs with tap k.
    w3 = jnp.transpose(conv_w, (1, 2, 0)).reshape(Cin, 3 * H).astype(compute_dtype)
    bc = conv_b.reshape(1, H).astype(jnp.float32)

    # fc weight with 1/L avg-pool scale folded in, lane-padded so the output store is a full
    # unmasked 128-lane vst (sliced back below; output bytes are tiny).
    n_out = max(128, (-(-out_w // 128)) * 128)
    wf = jnp.pad((fc_w.T / float(L)).astype(compute_dtype), ((0, 0), (0, n_out - out_w)))
    bf = jnp.pad(fc_b.reshape(1, out_w).astype(jnp.float32), ((0, 0), (0, n_out - out_w)))

    TB = block_b if block_b is not None else _pick_block_b(B, L, Cin, H, megacore=megacore)
    TB = _largest_divisor_leq(B, max(1, min(TB, B)))   # TB always divides B -> no jnp.pad of x

    out = pl.pallas_call(
        tcnn_kernel,
        out_shape=jax.ShapeDtypeStruct((B, n_out), x.dtype),
        grid=(B // TB,),
        in_specs=[
            pl.BlockSpec((TB, L, Cin), lambda b: (b, 0, 0)),    # per-step batch block of x (f32)
            pl.BlockSpec((Cin, 3 * H), lambda b: (0, 0)),       # conv weight (resident)
            pl.BlockSpec((1, H), lambda b: (0, 0)),             # conv bias
            pl.BlockSpec((H, n_out), lambda b: (0, 0)),         # fc weight (1/L folded in)
            pl.BlockSpec((1, n_out), lambda b: (0, 0)),         # fc bias
        ],
        out_specs=pl.BlockSpec((TB, n_out), lambda b: (b, 0)),  # lane-dense (TB, n_out) store
        compiler_params=pltpu.CompilerParams(
            dimension_semantics=("parallel",),
            vmem_limit_bytes=48 * 1024 * 1024,   # > default 16/32 MiB caps, < v7x's 64 MiB/TC
        ),
    )(x, w3, bc, wf, bf)

    return out[:, :out_w]


if __name__ == "__main__":
    B, L, Cin, out_w, H = 16, 16, 8, 4, 64

    key = jax.random.PRNGKey(0)
    k1, k2, k3, k4, k5 = jax.random.split(key, 5)

    x = jax.random.normal(k1, (B, L, Cin), jnp.float32)

    # Deterministic PyTorch-layout parameters (uniform bounds mimic nn.Conv1d / nn.Linear init).
    bound_c = 1.0 / (Cin * 3) ** 0.5
    conv_w = jax.random.uniform(k2, (H, Cin, 3), jnp.float32, -bound_c, bound_c)
    conv_b = jax.random.uniform(k3, (H,), jnp.float32, -bound_c, bound_c)
    bound_f = 1.0 / H ** 0.5
    fc_w = jax.random.uniform(k4, (out_w, H), jnp.float32, -bound_f, bound_f)
    fc_b = jax.random.uniform(k5, (out_w,), jnp.float32, -bound_f, bound_f)
    params = (conv_w, conv_b, fc_w, fc_b)

    # Pure-JAX reference of the PyTorch forward pass.
    xp = jnp.pad(x, ((0, 0), (1, 1), (0, 0)))
    conv = sum(jnp.einsum("blc,oc->blo", xp[:, k:k + L, :], conv_w[:, :, k])
               for k in range(3)) + conv_b
    ref = jnp.maximum(conv, 0.0).mean(axis=1) @ fc_w.T + fc_b

    # f32 matmul operands (v5e-friendly path), tight check.
    out_f32 = jax.block_until_ready(tcnn_forward(x, params, compute_dtype=jnp.float32))
    assert out_f32.shape == (B, out_w)
    assert jnp.allclose(out_f32, ref, atol=1e-4, rtol=1e-4)

    # bf16 matmul operands, f32 accumulation (v6e / v7x path), looser tolerance.
    out_bf16 = jax.block_until_ready(tcnn_forward(x, params, compute_dtype=jnp.bfloat16))
    assert out_bf16.shape == (B, out_w)
    assert jnp.allclose(out_bf16, ref, atol=5e-2, rtol=5e-2)

    # v7x-style even 2-step grid path (also valid on 1-TC chips, just extra steps).
    out_mc = jax.block_until_ready(tcnn_forward(x, params, megacore=True))
    assert jnp.allclose(out_mc, ref, atol=1e-4, rtol=1e-4)

    print("KERNEL_OK")
</pallas_src>

<mosaic_0001>
module attributes {stable_mosaic.version = 11 : i64} {
  func.func @tcnn_kernel(%arg0: i32, %arg1: memref<16x16x8xf32, #tpu.memory_space<vmem>>, %arg2: memref<8x192xf32, #tpu.memory_space<vmem>>, %arg3: memref<1x64xf32, #tpu.memory_space<vmem>>, %arg4: memref<64x128xf32, #tpu.memory_space<vmem>>, %arg5: memref<1x128xf32, #tpu.memory_space<vmem>>, %arg6: memref<16x128xf32, #tpu.memory_space<vmem>>) attributes {dimension_semantics = [#tpu.dimension_semantics<parallel>], iteration_bounds = array<i64: 1>, scalar_prefetch = 0 : i64, scratch_operands = 0 : i64, tpu.core_type = #tpu.core_type<tc>, window_params = [{transform_indices = @transform_0, window_bounds = array<i64: 16, 16, 8>}, {pipeline_mode = #tpu.pipeline_mode<synchronous>, transform_indices = @transform_1, window_bounds = array<i64: 8, 192>}, {pipeline_mode = #tpu.pipeline_mode<synchronous>, transform_indices = @transform_2, window_bounds = array<i64: 1, 64>}, {pipeline_mode = #tpu.pipeline_mode<synchronous>, transform_indices = @transform_3, window_bounds = array<i64: 64, 128>}, {pipeline_mode = #tpu.pipeline_mode<synchronous>, transform_indices = @transform_4, window_bounds = array<i64: 1, 128>}, {transform_indices = @transform_5, window_bounds = array<i64: 16, 128>}]} {
    %c0 = arith.constant 0 : index
    %c0_0 = arith.constant 0 : index
    %c0_1 = arith.constant 0 : index
    %0 = vector.load %arg1[%c0, %c0_0, %c0_1] : memref<16x16x8xf32, #tpu.memory_space<vmem>>, vector<16x16x8xf32>
    %1 = vector.shape_cast %0 : vector<16x16x8xf32> to vector<256x8xf32>
    %c0_2 = arith.constant 0 : index
    %c0_3 = arith.constant 0 : index
    %2 = vector.load %arg2[%c0_2, %c0_3] : memref<8x192xf32, #tpu.memory_space<vmem>>, vector<8x192xf32>
    %cst = arith.constant dense<0.000000e+00> : vector<256x192xf32>
    %3 = tpu.matmul %1, %2, %cst {dimension_numbers = #tpu.dot_dimension_numbers<[1], [0], [0], [1], [0, 0, 1, 1], [], []>} : vector<256x8xf32>, vector<8x192xf32>, vector<256x192xf32> -> vector<256x192xf32>
    %4 = vector.shape_cast %3 : vector<256x192xf32> to vector<16x16x192xf32>
    %cst_4 = arith.constant 0.000000e+00 : f32
    %5 = vector.broadcast %cst_4 : f32 to vector<16x1x64xf32>
    %6 = vector.extract_strided_slice %4 {offsets = [0, 0, 0], sizes = [16, 15, 64], strides = [1, 1, 1]} : vector<16x16x192xf32> to vector<16x15x64xf32>
    %7 = tpu.concatenate %5, %6 in 1 : vector<16x1x64xf32>, vector<16x15x64xf32> -> vector<16x16x64xf32>
    %8 = vector.extract_strided_slice %4 {offsets = [0, 1, 128], sizes = [16, 15, 64], strides = [1, 1, 1]} : vector<16x16x192xf32> to vector<16x15x64xf32>
    %9 = tpu.concatenate %8, %5 in 1 : vector<16x15x64xf32>, vector<16x1x64xf32> -> vector<16x16x64xf32>
    %10 = vector.extract_strided_slice %4 {offsets = [0, 0, 64], sizes = [16, 16, 64], strides = [1, 1, 1]} : vector<16x16x192xf32> to vector<16x16x64xf32>
    %11 = arith.addf %10, %7 : vector<16x16x64xf32>
    %12 = arith.addf %11, %9 : vector<16x16x64xf32>
    %c0_5 = arith.constant 0 : index
    %c0_6 = arith.constant 0 : index
    %13 = vector.load %arg3[%c0_5, %c0_6] : memref<1x64xf32, #tpu.memory_space<vmem>>, vector<1x64xf32>
    %14 = vector.shape_cast %13 : vector<1x64xf32> to vector<1x1x64xf32>
    %15 = vector.broadcast %14 : vector<1x1x64xf32> to vector<16x16x64xf32>
    %16 = arith.addf %12, %15 : vector<16x16x64xf32>
    %cst_7 = arith.constant 0.000000e+00 : f32
    %17 = vector.broadcast %cst_7 : f32 to vector<16x16x64xf32>
    %18 = arith.maximumf %16, %17 : vector<16x16x64xf32>
    %cst_8 = arith.constant dense<0.000000e+00> : vector<16x64xf32>
    %19 = vector.multi_reduction <add>, %18, %cst_8 [1] : vector<16x16x64xf32> to vector<16x64xf32>
    %c0_9 = arith.constant 0 : index
    %c0_10 = arith.constant 0 : index
    %20 = vector.load %arg4[%c0_9, %c0_10] : memref<64x128xf32, #tpu.memory_space<vmem>>, vector<64x128xf32>
    %cst_11 = arith.constant dense<0.000000e+00> : vector<16x128xf32>
    %21 = tpu.matmul %19, %20, %cst_11 {dimension_numbers = #tpu.dot_dimension_numbers<[1], [0], [0], [1], [0, 0, 1, 1], [], []>} : vector<16x64xf32>, vector<64x128xf32>, vector<16x128xf32> -> vector<16x128xf32>
    %c0_12 = arith.constant 0 : index
    %c0_13 = arith.constant 0 : index
    %22 = vector.load %arg5[%c0_12, %c0_13] : memref<1x128xf32, #tpu.memory_space<vmem>>, vector<1x128xf32>
    %23 = vector.broadcast %22 : vector<1x128xf32> to vector<16x128xf32>
    %24 = arith.addf %21, %23 : vector<16x128xf32>
    %c0_14 = arith.constant 0 : index
    %c0_15 = arith.constant 0 : index
    %25 = vector.load %arg6[%c0_14, %c0_15] : memref<16x128xf32, #tpu.memory_space<vmem>>, vector<16x128xf32>
    tpu.vector_store %arg6[%c0_14, %c0_15], %24 {strides = array<i32>} : memref<16x128xf32, #tpu.memory_space<vmem>>, vector<16x128xf32>,
    return
  }
  func.func @transform_0(%arg0: i32) -> (i32, i32, i32) {
    %c0_i32 = arith.constant 0 : i32
    %c0_i32_0 = arith.constant 0 : i32
    %c0_i32_1 = arith.constant 0 : i32
    return %arg0, %c0_i32, %c0_i32_0 : i32, i32, i32
  }
  func.func @transform_1(%arg0: i32) -> (i32, i32) {
    %c0_i32 = arith.constant 0 : i32
    %c0_i32_0 = arith.constant 0 : i32
    %c0_i32_1 = arith.constant 0 : i32
    return %c0_i32, %c0_i32_0 : i32, i32
  }
  func.func @transform_2(%arg0: i32) -> (i32, i32) {
    %c0_i32 = arith.constant 0 : i32
    %c0_i32_0 = arith.constant 0 : i32
    %c0_i32_1 = arith.constant 0 : i32
    return %c0_i32, %c0_i32_0 : i32, i32
  }
  func.func @transform_3(%arg0: i32) -> (i32, i32) {
    %c0_i32 = arith.constant 0 : i32
    %c0_i32_0 = arith.constant 0 : i32
    %c0_i32_1 = arith.constant 0 : i32
    return %c0_i32, %c0_i32_0 : i32, i32
  }
  func.func @transform_4(%arg0: i32) -> (i32, i32) {
    %c0_i32 = arith.constant 0 : i32
    %c0_i32_0 = arith.constant 0 : i32
    %c0_i32_1 = arith.constant 0 : i32
    return %c0_i32, %c0_i32_0 : i32, i32
  }
  func.func @transform_5(%arg0: i32) -> (i32, i32) {
    %c0_i32 = arith.constant 0 : i32
    %c0_i32_0 = arith.constant 0 : i32
    return %arg0, %c0_i32 : i32, i32
  }
}

</mosaic_0001>

<llo_original>
// kernel: tpu_custom_call.1
$region0: #{tpu_custom_call.1}
  #allocation0 [shape = 'u32[]', space=smem, size = 0x4, offset = 0x4, fixed_abs, tag = 'smem constant byte address 0x4 - core index']
  #allocation1 [shape = 'u32[144,128]{1,0:T(1,128)}', space=vmem, size = 0x12000, scoped, tag = 'internal scratch']
  %s0 = inlined_call_operand.vmem [shape: f32[16,16,8], index: 0, kind: input, shape index: {}]
  %s1 = inlined_call_operand.vmem [shape: f32[8,192], index: 1, kind: input, shape index: {}]
  %s2 = inlined_call_operand.vmem [shape: f32[1,64], index: 2, kind: input, shape index: {}]
  %s3 = inlined_call_operand.vmem [shape: f32[64,128], index: 3, kind: input, shape index: {}]
  %s4 = inlined_call_operand.vmem [shape: f32[1,128], index: 4, kind: input, shape index: {}]
  %s5 = inlined_call_operand.hbm [shape: f32[16,128], index: 5, kind: output, shape index: {}]
  %s6 = sld [smem:[#allocation0]]
  $region30: #{tpu_custom_call.1} parent=0
    _
  %s8 = ssub.s32 1, %s6
  %s9 = scalar_select 0, %s8, %s6
  $region1: #{tpu_custom_call.1} parent=0
    #allocation2 [shape = 'u8[8192]{0}', space=vmem, size = 0x2000, scoped, tag = 'output window, operand 0, single buffered']
    #allocation3 [shape = 's32[1]{0}', space=sflag, size = 0x4, scoped, tag = 'scoped memory for tpu_custom_call.1']
    %10 = vsyncpa [#allocation3], 0
    // Predicated region
    $region2: #{tpu_custom_call.1} parent=1 // pred_check
      _
    $region3: #{tpu_custom_call.1} parent=1 // pred_check_branch
      %12 = sbr.rel (0) target = $region5
    $region4: #{tpu_custom_call.1} parent=1 // pred_region
      _
    $region5: #{tpu_custom_call.1} parent=1 // pred_fallthru
      _
    // Predicated region
    $region6: #{tpu_custom_call.1} parent=1 // pred_check
      _
    $region7: #{tpu_custom_call.1} parent=1 // pred_check_branch
      %14 = sbr.rel (0) target = $region9
    $region8: #{tpu_custom_call.1} parent=1 // pred_region
      _
    $region9: #{tpu_custom_call.1} parent=1 // pred_fallthru
      _
    // Predicated region
    $region10: #{tpu_custom_call.1} parent=1 // pred_check
      _
    $region11: #{tpu_custom_call.1} parent=1 // pred_check_branch
      %16 = sbr.rel (0) target = $region13
    $region12: #{tpu_custom_call.1} parent=1 // pred_region
      _
    $region13: #{tpu_custom_call.1} parent=1 // pred_fallthru
      _
    // Predicated region
    $region14: #{tpu_custom_call.1} parent=1 // pred_check
      _
    $region15: #{tpu_custom_call.1} parent=1 // pred_check_branch
      %18 = sbr.rel (0) target = $region17
    $region16: #{tpu_custom_call.1} parent=1 // pred_region
      _
    $region17: #{tpu_custom_call.1} parent=1 // pred_fallthru
      _
    // Predicated region
    $region18: #{tpu_custom_call.1} parent=1 // pred_check
      _
    $region19: #{tpu_custom_call.1} parent=1 // pred_check_branch
      %20 = sbr.rel (0) target = $region21
    $region20: #{tpu_custom_call.1} parent=1 // pred_region
      _
    $region21: #{tpu_custom_call.1} parent=1 // pred_fallthru
      _
    %v21 = vld [vmem:[%s0] sm:$0xff]
    %v22 = vld [vmem:[%s0 + $0x8] sm:$0xff]
    %v23 = vld [vmem:[%s0 + $0x10] sm:$0xff]
    %v24 = vld [vmem:[%s0 + $0x18] sm:$0xff]
    %v25 = vld [vmem:[%s0 + $0x20] sm:$0xff]
    %v26 = vld [vmem:[%s0 + $0x28] sm:$0xff]
    %v27 = vld [vmem:[%s0 + $0x30] sm:$0xff]
    %v28 = vld [vmem:[%s0 + $0x38] sm:$0xff]
    %v29 = vld [vmem:[%s0 + $0x40] sm:$0xff]
    %v30 = vld [vmem:[%s0 + $0x48] sm:$0xff]
    %v31 = vld [vmem:[%s0 + $0x50] sm:$0xff]
    %v32 = vld [vmem:[%s0 + $0x58] sm:$0xff]
    %v33 = vld [vmem:[%s0 + $0x60] sm:$0xff]
    %v34 = vld [vmem:[%s0 + $0x68] sm:$0xff]
    %v35 = vld [vmem:[%s0 + $0x70] sm:$0xff]
    %v36 = vld [vmem:[%s0 + $0x78] sm:$0xff]
    %v37 = vld [vmem:[%s0 + $0x80] sm:$0xff]
    %v38 = vld [vmem:[%s0 + $0x88] sm:$0xff]
    %v39 = vld [vmem:[%s0 + $0x90] sm:$0xff]
    %v40 = vld [vmem:[%s0 + $0x98] sm:$0xff]
    %v41 = vld [vmem:[%s0 + $0xa0] sm:$0xff]
    %v42 = vld [vmem:[%s0 + $0xa8] sm:$0xff]
    %v43 = vld [vmem:[%s0 + $0xb0] sm:$0xff]
    %v44 = vld [vmem:[%s0 + $0xb8] sm:$0xff]
    %v45 = vld [vmem:[%s0 + $0xc0] sm:$0xff]
    %v46 = vld [vmem:[%s0 + $0xc8] sm:$0xff]
    %v47 = vld [vmem:[%s0 + $0xd0] sm:$0xff]
    %v48 = vld [vmem:[%s0 + $0xd8] sm:$0xff]
    %v49 = vld [vmem:[%s0 + $0xe0] sm:$0xff]
    %v50 = vld [vmem:[%s0 + $0xe8] sm:$0xff]
    %v51 = vld [vmem:[%s0 + $0xf0] sm:$0xff]
    %v52 = vld [vmem:[%s0 + $0xf8] sm:$0xff]
    %v53 = vld [vmem:[%s1] sm:$0xff]
    %v54 = vld [vmem:[%s1 + $0x8] sm:$0xff]
    %vm55 = vcmask 64512
    %v57 = vsel %vm55, %v21, 0
    %v60 = vsel %vm55, %v22, 0
    %v63 = vsel %vm55, %v23, 0
    %v66 = vsel %vm55, %v24, 0
    %v69 = vsel %vm55, %v25, 0
    %v72 = vsel %vm55, %v26, 0
    %v75 = vsel %vm55, %v27, 0
    %v78 = vsel %vm55, %v28, 0
    %v81 = vsel %vm55, %v29, 0
    %v84 = vsel %vm55, %v30, 0
    %v87 = vsel %vm55, %v31, 0
    %v90 = vsel %vm55, %v32, 0
    %v93 = vsel %vm55, %v33, 0
    %v96 = vsel %vm55, %v34, 0
    %v99 = vsel %vm55, %v35, 0
    %v102 = vsel %vm55, %v36, 0
    %v105 = vsel %vm55, %v37, 0
    %v108 = vsel %vm55, %v38, 0
    %v111 = vsel %vm55, %v39, 0
    %v114 = vsel %vm55, %v40, 0
    %v117 = vsel %vm55, %v41, 0
    %v120 = vsel %vm55, %v42, 0
    %v123 = vsel %vm55, %v43, 0
    %v126 = vsel %vm55, %v44, 0
    %v129 = vsel %vm55, %v45, 0
    %v132 = vsel %vm55, %v46, 0
    %v135 = vsel %vm55, %v47, 0
    %v138 = vsel %vm55, %v48, 0
    %v141 = vsel %vm55, %v49, 0
    %v144 = vsel %vm55, %v50, 0
    %v147 = vsel %vm55, %v51, 0
    %v150 = vsel %vm55, %v52, 0
    %152 = vmatprep.subr.mxu0 0.0
    %153 = vmatpush1.msra.mxu0 0.0
    %154 = vmatprep.subr.mxu0 0.0
    %155 = vmatpush1.msra.mxu0 0.0
    %156 = vmatprep.subr.mxu0 0.0
    %157 = vmatpush1.msra.mxu0 0.0
    %158 = vmatprep.subr.mxu0 0.0
    %159 = vmatpush1.msra.mxu0 0.0
    %160 = vmatprep.subr.mxu0 0.0
    %161 = vmatpush1.msra.mxu0 0.0
    %162 = vmatprep.subr.mxu0 0.0
    %163 = vmatpush1.msra.mxu0 0.0
    %164 = vmatprep.subr.mxu0 0.0
    %165 = vmatpush1.msra.mxu0 0.0
    %166 = vmatprep.subr.mxu0 0.0
    %167 = vmatpush1.msra.mxu0 0.0
    %168 = vmatprep.subr.mxu0 0.0
    %169 = vmatpush1.msra.mxu0 0.0
    %170 = vmatprep.subr.mxu0 0.0
    %171 = vmatpush1.msra.mxu0 0.0
    %172 = vmatprep.subr.mxu0 0.0
    %173 = vmatpush1.msra.mxu0 0.0
    %174 = vmatprep.subr.mxu0 0.0
    %175 = vmatpush1.msra.mxu0 0.0
    %176 = vmatprep.subr.mxu0 0.0
    %177 = vmatpush1.msra.mxu0 0.0
    %178 = vmatprep.subr.mxu0 0.0
    %179 = vmatpush1.msra.mxu0 0.0
    %180 = vmatprep.subr.mxu0 0.0
    %181 = vmatpush1.msra.mxu0 0.0
    %182 = vmatprep.subr.mxu0 %v54
    %183 = vmatpush1.msra.mxu0 %v53
    %184 = vmatprep.subr.mxu0 0.0
    %185 = vmatpush2.msra.mxu0 0.0
    %186 = vmatprep.subr.mxu0 0.0
    %187 = vmatpush2.msra.mxu0 0.0
    %188 = vmatprep.subr.mxu0 0.0
    %189 = vmatpush2.msra.mxu0 0.0
    %190 = vmatprep.subr.mxu0 0.0
    %191 = vmatpush2.msra.mxu0 0.0
    %192 = vmatprep.subr.mxu0 0.0
    %193 = vmatpush2.msra.mxu0 0.0
    %194 = vmatprep.subr.mxu0 0.0
    %195 = vmatpush2.msra.mxu0 0.0
    %196 = vmatprep.subr.mxu0 0.0
    %197 = vmatpush2.msra.mxu0 0.0
    %198 = vmatprep.subr.mxu0 0.0
    %199 = vmatpush2.msra.mxu0 0.0
    %200 = vmatprep.subr.mxu0 0.0
    %201 = vmatpush2.msra.mxu0 0.0
    %202 = vmatprep.subr.mxu0 0.0
    %203 = vmatpush2.msra.mxu0 0.0
    %204 = vmatprep.subr.mxu0 0.0
    %205 = vmatpush2.msra.mxu0 0.0
    %206 = vmatprep.subr.mxu0 0.0
    %207 = vmatpush2.msra.mxu0 0.0
    %208 = vmatprep.subr.mxu0 0.0
    %209 = vmatpush2.msra.mxu0 0.0
    %210 = vmatprep.subr.mxu0 0.0
    %211 = vmatpush2.msra.mxu0 0.0
    %212 = vmatprep.subr.mxu0 0.0
    %213 = vmatpush2.msra.mxu0 0.0
    %214 = vmatprep.subr.mxu0 0.0
    %215 = vmatpush2.msra.mxu0 0.0
    %216 = vmatprep.mubr.f32.mxu0 0.0
    %217 = vmatmul.mubr.f32.gmra.mxu0 %v57
    %v218 = vpop.f32.mrf.mxu0
    %v219 = vadd.f32 0.0, %v218
    %v220 = vpop.f32.mrf.mxu0
    %v221 = vadd.f32 0.0, %v220
    %222 = vmatprep.mubr.f32.mxu0 0.0
    %223 = vmatmul.mubr.f32.gmra.mxu0 %v60
    %v224 = vpop.f32.mrf.mxu0
    %v225 = vadd.f32 0.0, %v224
    %v226 = vpop.f32.mrf.mxu0
    %v227 = vadd.f32 0.0, %v226
    %228 = vmatprep.mubr.f32.mxu0 0.0
    %229 = vmatmul.mubr.f32.gmra.mxu0 %v63
    %v230 = vpop.f32.mrf.mxu0
    %v231 = vadd.f32 0.0, %v230
    %v232 = vpop.f32.mrf.mxu0
    %v233 = vadd.f32 0.0, %v232
    %234 = vmatprep.mubr.f32.mxu0 0.0
    %235 = vmatmul.mubr.f32.gmra.mxu0 %v66
    %v236 = vpop.f32.mrf.mxu0
    %v237 = vadd.f32 0.0, %v236
    %v238 = vpop.f32.mrf.mxu0
    %v239 = vadd.f32 0.0, %v238
    %240 = vmatprep.mubr.f32.mxu0 0.0
    %241 = vmatmul.mubr.f32.gmra.mxu0 %v69
    %v242 = vpop.f32.mrf.mxu0
    %v243 = vadd.f32 0.0, %v242
    %v244 = vpop.f32.mrf.mxu0
    %v245 = vadd.f32 0.0, %v244
    %246 = vmatprep.mubr.f32.mxu0 0.0
    %247 = vmatmul.mubr.f32.gmra.mxu0 %v72
    %v248 = vpop.f32.mrf.mxu0
    %v249 = vadd.f32 0.0, %v248
    %v250 = vpop.f32.mrf.mxu0
    %v251 = vadd.f32 0.0, %v250
    %252 = vmatprep.mubr.f32.mxu0 0.0
    %253 = vmatmul.mubr.f32.gmra.mxu0 %v75
    %v254 = vpop.f32.mrf.mxu0
    %v255 = vadd.f32 0.0, %v254
    %v256 = vpop.f32.mrf.mxu0
    %v257 = vadd.f32 0.0, %v256
    %258 = vmatprep.mubr.f32.mxu0 0.0
    %259 = vmatmul.mubr.f32.gmra.mxu0 %v78
    %v260 = vpop.f32.mrf.mxu0
    %v261 = vadd.f32 0.0, %v260
    %v262 = vpop.f32.mrf.mxu0
    %v263 = vadd.f32 0.0, %v262
    %264 = vmatprep.mubr.f32.mxu0 0.0
    %265 = vmatmul.mubr.f32.gmra.mxu0 %v81
    %v266 = vpop.f32.mrf.mxu0
    %v267 = vadd.f32 0.0, %v266
    %v268 = vpop.f32.mrf.mxu0
    %v269 = vadd.f32 0.0, %v268
    %270 = vmatprep.mubr.f32.mxu0 0.0
    %271 = vmatmul.mubr.f32.gmra.mxu0 %v84
    %v272 = vpop.f32.mrf.mxu0
    %v273 = vadd.f32 0.0, %v272
    %v274 = vpop.f32.mrf.mxu0
    %v275 = vadd.f32 0.0, %v274
    %276 = vmatprep.mubr.f32.mxu0 0.0
    %277 = vmatmul.mubr.f32.gmra.mxu0 %v87
    %v278 = vpop.f32.mrf.mxu0
    %v279 = vadd.f32 0.0, %v278
    %v280 = vpop.f32.mrf.mxu0
    %v281 = vadd.f32 0.0, %v280
    %282 = vmatprep.mubr.f32.mxu0 0.0
    %283 = vmatmul.mubr.f32.gmra.mxu0 %v90
    %v284 = vpop.f32.mrf.mxu0
    %v285 = vadd.f32 0.0, %v284
    %v286 = vpop.f32.mrf.mxu0
    %v287 = vadd.f32 0.0, %v286
    %288 = vmatprep.mubr.f32.mxu0 0.0
    %289 = vmatmul.mubr.f32.gmra.mxu0 %v93
    %v290 = vpop.f32.mrf.mxu0
    %v291 = vadd.f32 0.0, %v290
    %v292 = vpop.f32.mrf.mxu0
    %v293 = vadd.f32 0.0, %v292
    %294 = vmatprep.mubr.f32.mxu0 0.0
    %295 = vmatmul.mubr.f32.gmra.mxu0 %v96
    %v296 = vpop.f32.mrf.mxu0
    %v297 = vadd.f32 0.0, %v296
    %v298 = vpop.f32.mrf.mxu0
    %v299 = vadd.f32 0.0, %v298
    %300 = vmatprep.mubr.f32.mxu0 0.0
    %301 = vmatmul.mubr.f32.gmra.mxu0 %v99
    %v302 = vpop.f32.mrf.mxu0
    %v303 = vadd.f32 0.0, %v302
    %v304 = vpop.f32.mrf.mxu0
    %v305 = vadd.f32 0.0, %v304
    %306 = vmatprep.mubr.f32.mxu0 0.0
    %307 = vmatmul.mubr.f32.gmra.mxu0 %v102
    %v308 = vpop.f32.mrf.mxu0
    %v309 = vadd.f32 0.0, %v308
    %v310 = vpop.f32.mrf.mxu0
    %v311 = vadd.f32 0.0, %v310
    %312 = vmatprep.mubr.f32.mxu0 0.0
    %313 = vmatmul.mubr.f32.gmra.mxu0 %v105
    %v314 = vpop.f32.mrf.mxu0
    %v315 = vadd.f32 0.0, %v314
    %v316 = vpop.f32.mrf.mxu0
    %v317 = vadd.f32 0.0, %v316
    %318 = vmatprep.mubr.f32.mxu0 0.0
    %319 = vmatmul.mubr.f32.gmra.mxu0 %v108
    %v320 = vpop.f32.mrf.mxu0
    %v321 = vadd.f32 0.0, %v320
    %v322 = vpop.f32.mrf.mxu0
    %v323 = vadd.f32 0.0, %v322
    %324 = vmatprep.mubr.f32.mxu0 0.0
    %325 = vmatmul.mubr.f32.gmra.mxu0 %v111
    %v326 = vpop.f32.mrf.mxu0
    %v327 = vadd.f32 0.0, %v326
    %v328 = vpop.f32.mrf.mxu0
    %v329 = vadd.f32 0.0, %v328
    %330 = vmatprep.mubr.f32.mxu0 0.0
    %331 = vmatmul.mubr.f32.gmra.mxu0 %v114
    %v332 = vpop.f32.mrf.mxu0
    %v333 = vadd.f32 0.0, %v332
    %v334 = vpop.f32.mrf.mxu0
    %v335 = vadd.f32 0.0, %v334
    %336 = vmatprep.mubr.f32.mxu0 0.0
    %337 = vmatmul.mubr.f32.gmra.mxu0 %v117
    %v338 = vpop.f32.mrf.mxu0
    %v339 = vadd.f32 0.0, %v338
    %v340 = vpop.f32.mrf.mxu0
    %v341 = vadd.f32 0.0, %v340
    %342 = vmatprep.mubr.f32.mxu0 0.0
    %343 = vmatmul.mubr.f32.gmra.mxu0 %v120
    %v344 = vpop.f32.mrf.mxu0
    %v345 = vadd.f32 0.0, %v344
    %v346 = vpop.f32.mrf.mxu0
    %v347 = vadd.f32 0.0, %v346
    %348 = vmatprep.mubr.f32.mxu0 0.0
    %349 = vmatmul.mubr.f32.gmra.mxu0 %v123
    %v350 = vpop.f32.mrf.mxu0
    %v351 = vadd.f32 0.0, %v350
    %v352 = vpop.f32.mrf.mxu0
    %v353 = vadd.f32 0.0, %v352
    %354 = vmatprep.mubr.f32.mxu0 0.0
    %355 = vmatmul.mubr.f32.gmra.mxu0 %v126
    %v356 = vpop.f32.mrf.mxu0
    %v357 = vadd.f32 0.0, %v356
    %v358 = vpop.f32.mrf.mxu0
    %v359 = vadd.f32 0.0, %v358
    %360 = vmatprep.mubr.f32.mxu0 0.0
    %361 = vmatmul.mubr.f32.gmra.mxu0 %v129
    %v362 = vpop.f32.mrf.mxu0
    %v363 = vadd.f32 0.0, %v362
    %v364 = vpop.f32.mrf.mxu0
    %v365 = vadd.f32 0.0, %v364
    %366 = vmatprep.mubr.f32.mxu0 0.0
    %367 = vmatmul.mubr.f32.gmra.mxu0 %v132
    %v368 = vpop.f32.mrf.mxu0
    %v369 = vadd.f32 0.0, %v368
    %v370 = vpop.f32.mrf.mxu0
    %v371 = vadd.f32 0.0, %v370
    %372 = vmatprep.mubr.f32.mxu0 0.0
    %373 = vmatmul.mubr.f32.gmra.mxu0 %v135
    %v374 = vpop.f32.mrf.mxu0
    %v375 = vadd.f32 0.0, %v374
    %v376 = vpop.f32.mrf.mxu0
    %v377 = vadd.f32 0.0, %v376
    %378 = vmatprep.mubr.f32.mxu0 0.0
    %379 = vmatmul.mubr.f32.gmra.mxu0 %v138
    %v380 = vpop.f32.mrf.mxu0
    %v381 = vadd.f32 0.0, %v380
    %v382 = vpop.f32.mrf.mxu0
    %v383 = vadd.f32 0.0, %v382
    %384 = vmatprep.mubr.f32.mxu0 0.0
    %385 = vmatmul.mubr.f32.gmra.mxu0 %v141
    %v386 = vpop.f32.mrf.mxu0
    %v387 = vadd.f32 0.0, %v386
    %v388 = vpop.f32.mrf.mxu0
    %v389 = vadd.f32 0.0, %v388
    %390 = vmatprep.mubr.f32.mxu0 0.0
    %391 = vmatmul.mubr.f32.gmra.mxu0 %v144
    %v392 = vpop.f32.mrf.mxu0
    %v393 = vadd.f32 0.0, %v392
    %v394 = vpop.f32.mrf.mxu0
    %v395 = vadd.f32 0.0, %v394
    %396 = vmatprep.mubr.f32.mxu0 0.0
    %397 = vmatmul.mubr.f32.gmra.mxu0 %v147
    %v398 = vpop.f32.mrf.mxu0
    %v399 = vadd.f32 0.0, %v398
    %v400 = vpop.f32.mrf.mxu0
    %v401 = vadd.f32 0.0, %v400
    %402 = vmatprep.mubr.f32.mxu0 0.0
    %403 = vmatmul.mubr.f32.gmra.mxu0 %v150
    %v404 = vpop.f32.mrf.mxu0
    %v405 = vadd.f32 0.0, %v404
    %v406 = vpop.f32.mrf.mxu0
    %v407 = vadd.f32 0.0, %v406
    %408 = vdwg.mxu0
    %vm441 = vcmask 1040384
    %v442 = vrot.slane %v219, 7
    %v443 = vrot.slane %v225, 7
    %v444 = vsel %vm441, %v442, %v443
    %v445 = vrot.slane %v231, 7
    %v446 = vrot.slane %v237, 7
    %v447 = vsel %vm441, %v445, %v446
    %v448 = vrot.slane %v243, 7
    %v449 = vrot.slane %v249, 7
    %v450 = vsel %vm441, %v448, %v449
    %v451 = vrot.slane %v255, 7
    %v452 = vrot.slane %v261, 7
    %v453 = vsel %vm441, %v451, %v452
    %v454 = vrot.slane %v267, 7
    %v455 = vrot.slane %v273, 7
    %v456 = vsel %vm441, %v454, %v455
    %v457 = vrot.slane %v279, 7
    %v458 = vrot.slane %v285, 7
    %v459 = vsel %vm441, %v457, %v458
    %v460 = vrot.slane %v291, 7
    %v461 = vrot.slane %v297, 7
    %v462 = vsel %vm441, %v460, %v461
    %v463 = vrot.slane %v303, 7
    %v464 = vrot.slane %v309, 7
    %v465 = vsel %vm441, %v463, %v464
    %v466 = vrot.slane %v315, 7
    %v467 = vrot.slane %v321, 7
    %v468 = vsel %vm441, %v466, %v467
    %v469 = vrot.slane %v327, 7
    %v470 = vrot.slane %v333, 7
    %v471 = vsel %vm441, %v469, %v470
    %v472 = vrot.slane %v339, 7
    %v473 = vrot.slane %v345, 7
    %v474 = vsel %vm441, %v472, %v473
    %v475 = vrot.slane %v351, 7
    %v476 = vrot.slane %v357, 7
    %v477 = vsel %vm441, %v475, %v476
    %v478 = vrot.slane %v363, 7
    %v479 = vrot.slane %v369, 7
    %v480 = vsel %vm441, %v478, %v479
    %v481 = vrot.slane %v375, 7
    %v482 = vrot.slane %v381, 7
    %v483 = vsel %vm441, %v481, %v482
    %v484 = vrot.slane %v387, 7
    %v485 = vrot.slane %v393, 7
    %v486 = vsel %vm441, %v484, %v485
    %v487 = vrot.slane %v399, 7
    %v488 = vrot.slane %v405, 7
    %v489 = vsel %vm441, %v487, %v488
    %v506 = vsel %vm441, 0.0, %v442
    %v507 = vsel %vm441, 0.0, %v445
    %v508 = vsel %vm441, 0.0, %v448
    %v509 = vsel %vm441, 0.0, %v451
    %v510 = vsel %vm441, 0.0, %v454
    %v511 = vsel %vm441, 0.0, %v457
    %v512 = vsel %vm441, 0.0, %v460
    %v513 = vsel %vm441, 0.0, %v463
    %v514 = vsel %vm441, 0.0, %v466
    %v515 = vsel %vm441, 0.0, %v469
    %v516 = vsel %vm441, 0.0, %v472
    %v517 = vsel %vm441, 0.0, %v475
    %v518 = vsel %vm441, 0.0, %v478
    %v519 = vsel %vm441, 0.0, %v481
    %v520 = vsel %vm441, 0.0, %v484
    %v521 = vsel %vm441, 0.0, %v487
    %vm554 = vcmask 1046528
    %v555 = vrot.slane %v221, 1
    %v556 = vrot.slane %v227, 1
    %v557 = vsel %vm554, %v555, %v556
    %v558 = vrot.slane %v233, 1
    %v559 = vrot.slane %v239, 1
    %v560 = vsel %vm554, %v558, %v559
    %v561 = vrot.slane %v245, 1
    %v562 = vrot.slane %v251, 1
    %v563 = vsel %vm554, %v561, %v562
    %v564 = vrot.slane %v257, 1
    %v565 = vrot.slane %v263, 1
    %v566 = vsel %vm554, %v564, %v565
    %v567 = vrot.slane %v269, 1
    %v568 = vrot.slane %v275, 1
    %v569 = vsel %vm554, %v567, %v568
    %v570 = vrot.slane %v281, 1
    %v571 = vrot.slane %v287, 1
    %v572 = vsel %vm554, %v570, %v571
    %v573 = vrot.slane %v293, 1
    %v574 = vrot.slane %v299, 1
    %v575 = vsel %vm554, %v573, %v574
    %v576 = vrot.slane %v305, 1
    %v577 = vrot.slane %v311, 1
    %v578 = vsel %vm554, %v576, %v577
    %v579 = vrot.slane %v317, 1
    %v580 = vrot.slane %v323, 1
    %v581 = vsel %vm554, %v579, %v580
    %v582 = vrot.slane %v329, 1
    %v583 = vrot.slane %v335, 1
    %v584 = vsel %vm554, %v582, %v583
    %v585 = vrot.slane %v341, 1
    %v586 = vrot.slane %v347, 1
    %v587 = vsel %vm554, %v585, %v586
    %v588 = vrot.slane %v353, 1
    %v589 = vrot.slane %v359, 1
    %v590 = vsel %vm554, %v588, %v589
    %v591 = vrot.slane %v365, 1
    %v592 = vrot.slane %v371, 1
    %v593 = vsel %vm554, %v591, %v592
    %v594 = vrot.slane %v377, 1
    %v595 = vrot.slane %v383, 1
    %v596 = vsel %vm554, %v594, %v595
    %v597 = vrot.slane %v389, 1
    %v598 = vrot.slane %v395, 1
    %v599 = vsel %vm554, %v597, %v598
    %v600 = vrot.slane %v401, 1
    %v601 = vrot.slane %v407, 1
    %v602 = vsel %vm554, %v600, %v601
    %v619 = vsel %vm554, %v556, 0.0
    %v620 = vsel %vm554, %v559, 0.0
    %v621 = vsel %vm554, %v562, 0.0
    %v622 = vsel %vm554, %v565, 0.0
    %v623 = vsel %vm554, %v568, 0.0
    %v624 = vsel %vm554, %v571, 0.0
    %v625 = vsel %vm554, %v574, 0.0
    %v626 = vsel %vm554, %v577, 0.0
    %v627 = vsel %vm554, %v580, 0.0
    %v628 = vsel %vm554, %v583, 0.0
    %v629 = vsel %vm554, %v586, 0.0
    %v630 = vsel %vm554, %v589, 0.0
    %v631 = vsel %vm554, %v592, 0.0
    %v632 = vsel %vm554, %v595, 0.0
    %v633 = vsel %vm554, %v598, 0.0
    %v634 = vsel %vm554, %v601, 0.0
    %651 = vrot.lane.b32.xlu0 %v506, 64
    %v652 = vpop.permute.xlu0 %651
    %653 = vrot.lane.b32.xlu0 %v444, 64
    %v654 = vpop.permute.xlu0 %653
    %655 = vrot.lane.b32.xlu0 %v507, 64
    %v656 = vpop.permute.xlu0 %655
    %657 = vrot.lane.b32.xlu0 %v447, 64
    %v658 = vpop.permute.xlu0 %657
    %659 = vrot.lane.b32.xlu0 %v508, 64
    %v660 = vpop.permute.xlu0 %659
    %661 = vrot.lane.b32.xlu0 %v450, 64
    %v662 = vpop.permute.xlu0 %661
    %663 = vrot.lane.b32.xlu0 %v509, 64
    %v664 = vpop.permute.xlu0 %663
    %665 = vrot.lane.b32.xlu0 %v453, 64
    %v666 = vpop.permute.xlu0 %665
    %667 = vrot.lane.b32.xlu0 %v510, 64
    %v668 = vpop.permute.xlu0 %667
    %669 = vrot.lane.b32.xlu0 %v456, 64
    %v670 = vpop.permute.xlu0 %669
    %671 = vrot.lane.b32.xlu0 %v511, 64
    %v672 = vpop.permute.xlu0 %671
    %673 = vrot.lane.b32.xlu0 %v459, 64
    %v674 = vpop.permute.xlu0 %673
    %675 = vrot.lane.b32.xlu0 %v512, 64
    %v676 = vpop.permute.xlu0 %675
    %677 = vrot.lane.b32.xlu0 %v462, 64
    %v678 = vpop.permute.xlu0 %677
    %679 = vrot.lane.b32.xlu0 %v513, 64
    %v680 = vpop.permute.xlu0 %679
    %681 = vrot.lane.b32.xlu0 %v465, 64
    %v682 = vpop.permute.xlu0 %681
    %683 = vrot.lane.b32.xlu0 %v514, 64
    %v684 = vpop.permute.xlu0 %683
    %685 = vrot.lane.b32.xlu0 %v468, 64
    %v686 = vpop.permute.xlu0 %685
    %687 = vrot.lane.b32.xlu0 %v515, 64
    %v688 = vpop.permute.xlu0 %687
    %689 = vrot.lane.b32.xlu0 %v471, 64
    %v690 = vpop.permute.xlu0 %689
    %691 = vrot.lane.b32.xlu0 %v516, 64
    %v692 = vpop.permute.xlu0 %691
    %693 = vrot.lane.b32.xlu0 %v474, 64
    %v694 = vpop.permute.xlu0 %693
    %695 = vrot.lane.b32.xlu0 %v517, 64
    %v696 = vpop.permute.xlu0 %695
    %697 = vrot.lane.b32.xlu0 %v477, 64
    %v698 = vpop.permute.xlu0 %697
    %699 = vrot.lane.b32.xlu0 %v518, 64
    %v700 = vpop.permute.xlu0 %699
    %701 = vrot.lane.b32.xlu0 %v480, 64
    %v702 = vpop.permute.xlu0 %701
    %703 = vrot.lane.b32.xlu0 %v519, 64
    %v704 = vpop.permute.xlu0 %703
    %705 = vrot.lane.b32.xlu0 %v483, 64
    %v706 = vpop.permute.xlu0 %705
    %707 = vrot.lane.b32.xlu0 %v520, 64
    %v708 = vpop.permute.xlu0 %707
    %709 = vrot.lane.b32.xlu0 %v486, 64
    %v710 = vpop.permute.xlu0 %709
    %711 = vrot.lane.b32.xlu0 %v521, 64
    %v712 = vpop.permute.xlu0 %711
    %713 = vrot.lane.b32.xlu0 %v489, 64
    %v714 = vpop.permute.xlu0 %713
    %v747 = vadd.f32 %v219, %v652
    %v748 = vadd.f32 %v225, %v654
    %v749 = vadd.f32 %v231, %v656
    %v750 = vadd.f32 %v237, %v658
    %v751 = vadd.f32 %v243, %v660
    %v752 = vadd.f32 %v249, %v662
    %v753 = vadd.f32 %v255, %v664
    %v754 = vadd.f32 %v261, %v666
    %v755 = vadd.f32 %v267, %v668
    %v756 = vadd.f32 %v273, %v670
    %v757 = vadd.f32 %v279, %v672
    %v758 = vadd.f32 %v285, %v674
    %v759 = vadd.f32 %v291, %v676
    %v760 = vadd.f32 %v297, %v678
    %v761 = vadd.f32 %v303, %v680
    %v762 = vadd.f32 %v309, %v682
    %v763 = vadd.f32 %v315, %v684
    %v764 = vadd.f32 %v321, %v686
    %v765 = vadd.f32 %v327, %v688
    %v766 = vadd.f32 %v333, %v690
    %v767 = vadd.f32 %v339, %v692
    %v768 = vadd.f32 %v345, %v694
    %v769 = vadd.f32 %v351, %v696
    %v770 = vadd.f32 %v357, %v698
    %v771 = vadd.f32 %v363, %v700
    %v772 = vadd.f32 %v369, %v702
    %v773 = vadd.f32 %v375, %v704
    %v774 = vadd.f32 %v381, %v706
    %v775 = vadd.f32 %v387, %v708
    %v776 = vadd.f32 %v393, %v710
    %v777 = vadd.f32 %v399, %v712
    %v778 = vadd.f32 %v405, %v714
    %795 = vrot.lane.b32.xlu0 %v557, 64
    %v796 = vpop.permute.xlu0 %795
    %797 = vrot.lane.b32.xlu0 %v619, 64
    %v798 = vpop.permute.xlu0 %797
    %799 = vrot.lane.b32.xlu0 %v560, 64
    %v800 = vpop.permute.xlu0 %799
    %801 = vrot.lane.b32.xlu0 %v620, 64
    %v802 = vpop.permute.xlu0 %801
    %803 = vrot.lane.b32.xlu0 %v563, 64
    %v804 = vpop.permute.xlu0 %803
    %805 = vrot.lane.b32.xlu0 %v621, 64
    %v806 = vpop.permute.xlu0 %805
    %807 = vrot.lane.b32.xlu0 %v566, 64
    %v808 = vpop.permute.xlu0 %807
    %809 = vrot.lane.b32.xlu0 %v622, 64
    %v810 = vpop.permute.xlu0 %809
    %811 = vrot.lane.b32.xlu0 %v569, 64
    %v812 = vpop.permute.xlu0 %811
    %813 = vrot.lane.b32.xlu0 %v623, 64
    %v814 = vpop.permute.xlu0 %813
    %815 = vrot.lane.b32.xlu0 %v572, 64
    %v816 = vpop.permute.xlu0 %815
    %817 = vrot.lane.b32.xlu0 %v624, 64
    %v818 = vpop.permute.xlu0 %817
    %819 = vrot.lane.b32.xlu0 %v575, 64
    %v820 = vpop.permute.xlu0 %819
    %821 = vrot.lane.b32.xlu0 %v625, 64
    %v822 = vpop.permute.xlu0 %821
    %823 = vrot.lane.b32.xlu0 %v578, 64
    %v824 = vpop.permute.xlu0 %823
    %825 = vrot.lane.b32.xlu0 %v626, 64
    %v826 = vpop.permute.xlu0 %825
    %827 = vrot.lane.b32.xlu0 %v581, 64
    %v828 = vpop.permute.xlu0 %827
    %829 = vrot.lane.b32.xlu0 %v627, 64
    %v830 = vpop.permute.xlu0 %829
    %831 = vrot.lane.b32.xlu0 %v584, 64
    %v832 = vpop.permute.xlu0 %831
    %833 = vrot.lane.b32.xlu0 %v628, 64
    %v834 = vpop.permute.xlu0 %833
    %835 = vrot.lane.b32.xlu0 %v587, 64
    %v836 = vpop.permute.xlu0 %835
    %837 = vrot.lane.b32.xlu0 %v629, 64
    %v838 = vpop.permute.xlu0 %837
    %839 = vrot.lane.b32.xlu0 %v590, 64
    %v840 = vpop.permute.xlu0 %839
    %841 = vrot.lane.b32.xlu0 %v630, 64
    %v842 = vpop.permute.xlu0 %841
    %843 = vrot.lane.b32.xlu0 %v593, 64
    %v844 = vpop.permute.xlu0 %843
    %845 = vrot.lane.b32.xlu0 %v631, 64
    %v846 = vpop.permute.xlu0 %845
    %847 = vrot.lane.b32.xlu0 %v596, 64
    %v848 = vpop.permute.xlu0 %847
    %849 = vrot.lane.b32.xlu0 %v632, 64
    %v850 = vpop.permute.xlu0 %849
    %851 = vrot.lane.b32.xlu0 %v599, 64
    %v852 = vpop.permute.xlu0 %851
    %853 = vrot.lane.b32.xlu0 %v633, 64
    %v854 = vpop.permute.xlu0 %853
    %855 = vrot.lane.b32.xlu0 %v602, 64
    %v856 = vpop.permute.xlu0 %855
    %857 = vrot.lane.b32.xlu0 %v634, 64
    %v858 = vpop.permute.xlu0 %857
    %v891 = vadd.f32 %v747, %v796
    %v892 = vadd.f32 %v748, %v798
    %v893 = vadd.f32 %v749, %v800
    %v894 = vadd.f32 %v750, %v802
    %v895 = vadd.f32 %v751, %v804
    %v896 = vadd.f32 %v752, %v806
    %v897 = vadd.f32 %v753, %v808
    %v898 = vadd.f32 %v754, %v810
    %v899 = vadd.f32 %v755, %v812
    %v900 = vadd.f32 %v756, %v814
    %v901 = vadd.f32 %v757, %v816
    %v902 = vadd.f32 %v758, %v818
    %v903 = vadd.f32 %v759, %v820
    %v904 = vadd.f32 %v760, %v822
    %v905 = vadd.f32 %v761, %v824
    %v906 = vadd.f32 %v762, %v826
    %v907 = vadd.f32 %v763, %v828
    %v908 = vadd.f32 %v764, %v830
    %v909 = vadd.f32 %v765, %v832
    %v910 = vadd.f32 %v766, %v834
    %v911 = vadd.f32 %v767, %v836
    %v912 = vadd.f32 %v768, %v838
    %v913 = vadd.f32 %v769, %v840
    %v914 = vadd.f32 %v770, %v842
    %v915 = vadd.f32 %v771, %v844
    %v916 = vadd.f32 %v772, %v846
    %v917 = vadd.f32 %v773, %v848
    %v918 = vadd.f32 %v774, %v850
    %v919 = vadd.f32 %v775, %v852
    %v920 = vadd.f32 %v776, %v854
    %v921 = vadd.f32 %v777, %v856
    %v922 = vadd.f32 %v778, %v858
    %v923 = vld [vmem:[%s2] sm:$0x1]
    %v925 = vlaneseq
    %v926 = vshrl.u32 %v925, 7
    %v927 = vsub.s32 0, %v926
    %v928 = vrot.slane %v923, %v927
    %929 = vrot.lane.b32.xlu0 %v928, 64
    %v930 = vpop.permute.xlu0 %929
    %v932 = vadd.f32 %v891, %v930
    %v933 = vadd.f32 %v892, %v930
    %v934 = vadd.f32 %v893, %v930
    %v935 = vadd.f32 %v894, %v930
    %v936 = vadd.f32 %v895, %v930
    %v937 = vadd.f32 %v896, %v930
    %v938 = vadd.f32 %v897, %v930
    %v939 = vadd.f32 %v898, %v930
    %v940 = vadd.f32 %v899, %v930
    %v941 = vadd.f32 %v900, %v930
    %v942 = vadd.f32 %v901, %v930
    %v943 = vadd.f32 %v902, %v930
    %v944 = vadd.f32 %v903, %v930
    %v945 = vadd.f32 %v904, %v930
    %v946 = vadd.f32 %v905, %v930
    %v947 = vadd.f32 %v906, %v930
    %v948 = vadd.f32 %v907, %v930
    %v949 = vadd.f32 %v908, %v930
    %v950 = vadd.f32 %v909, %v930
    %v951 = vadd.f32 %v910, %v930
    %v952 = vadd.f32 %v911, %v930
    %v953 = vadd.f32 %v912, %v930
    %v954 = vadd.f32 %v913, %v930
    %v955 = vadd.f32 %v914, %v930
    %v956 = vadd.f32 %v915, %v930
    %v957 = vadd.f32 %v916, %v930
    %v958 = vadd.f32 %v917, %v930
    %v959 = vadd.f32 %v918, %v930
    %v960 = vadd.f32 %v919, %v930
    %v961 = vadd.f32 %v920, %v930
    %v962 = vadd.f32 %v921, %v930
    %v963 = vadd.f32 %v922, %v930
    %v964 = vmax.f32 %v932, 0.0
    %v965 = vmax.f32 %v933, 0.0
    %v966 = vmax.f32 %v934, 0.0
    %v967 = vmax.f32 %v935, 0.0
    %v968 = vmax.f32 %v936, 0.0
    %v969 = vmax.f32 %v937, 0.0
    %v970 = vmax.f32 %v938, 0.0
    %v971 = vmax.f32 %v939, 0.0
    %v972 = vmax.f32 %v940, 0.0
    %v973 = vmax.f32 %v941, 0.0
    %v974 = vmax.f32 %v942, 0.0
    %v975 = vmax.f32 %v943, 0.0
    %v976 = vmax.f32 %v944, 0.0
    %v977 = vmax.f32 %v945, 0.0
    %v978 = vmax.f32 %v946, 0.0
    %v979 = vmax.f32 %v947, 0.0
    %v980 = vmax.f32 %v948, 0.0
    %v981 = vmax.f32 %v949, 0.0
    %v982 = vmax.f32 %v950, 0.0
    %v983 = vmax.f32 %v951, 0.0
    %v984 = vmax.f32 %v952, 0.0
    %v985 = vmax.f32 %v953, 0.0
    %v986 = vmax.f32 %v954, 0.0
    %v987 = vmax.f32 %v955, 0.0
    %v988 = vmax.f32 %v956, 0.0
    %v989 = vmax.f32 %v957, 0.0
    %v990 = vmax.f32 %v958, 0.0
    %v991 = vmax.f32 %v959, 0.0
    %v992 = vmax.f32 %v960, 0.0
    %v993 = vmax.f32 %v961, 0.0
    %v994 = vmax.f32 %v962, 0.0
    %v995 = vmax.f32 %v963, 0.0
    %vm996 = vcmask 1048064
    %v997 = vsel %vm996, %v964, 0.0
    %v998 = vsel %vm996, %v965, 0.0
    %v999 = vadd.f32 %v997, %v998
    %v1000 = vrot.slane %v999, 4
    %v1001 = vadd.f32 %v999, %v1000
    %v1002 = vrot.slane %v1001, 2
    %v1003 = vadd.f32 %v1001, %v1002
    %v1004 = vrot.slane %v1003, 1
    %v1005 = vadd.f32 %v1003, %v1004
    %v1006 = vsel %vm996, %v966, 0.0
    %v1007 = vsel %vm996, %v967, 0.0
    %v1008 = vadd.f32 %v1006, %v1007
    %v1009 = vrot.slane %v1008, 4
    %v1010 = vadd.f32 %v1008, %v1009
    %v1011 = vrot.slane %v1010, 2
    %v1012 = vadd.f32 %v1010, %v1011
    %v1013 = vrot.slane %v1012, 1
    %v1014 = vadd.f32 %v1012, %v1013
    %v1015 = vsel %vm996, %v968, 0.0
    %v1016 = vsel %vm996, %v969, 0.0
    %v1017 = vadd.f32 %v1015, %v1016
    %v1018 = vrot.slane %v1017, 4
    %v1019 = vadd.f32 %v1017, %v1018
    %v1020 = vrot.slane %v1019, 2
    %v1021 = vadd.f32 %v1019, %v1020
    %v1022 = vrot.slane %v1021, 1
    %v1023 = vadd.f32 %v1021, %v1022
    %v1024 = vsel %vm996, %v970, 0.0
    %v1025 = vsel %vm996, %v971, 0.0
    %v1026 = vadd.f32 %v1024, %v1025
    %v1027 = vrot.slane %v1026, 4
    %v1028 = vadd.f32 %v1026, %v1027
    %v1029 = vrot.slane %v1028, 2
    %v1030 = vadd.f32 %v1028, %v1029
    %v1031 = vrot.slane %v1030, 1
    %v1032 = vadd.f32 %v1030, %v1031
    %v1033 = vsel %vm996, %v972, 0.0
    %v1034 = vsel %vm996, %v973, 0.0
    %v1035 = vadd.f32 %v1033, %v1034
    %v1036 = vrot.slane %v1035, 4
    %v1037 = vadd.f32 %v1035, %v1036
    %v1038 = vrot.slane %v1037, 2
    %v1039 = vadd.f32 %v1037, %v1038
    %v1040 = vrot.slane %v1039, 1
    %v1041 = vadd.f32 %v1039, %v1040
    %v1042 = vsel %vm996, %v974, 0.0
    %v1043 = vsel %vm996, %v975, 0.0
    %v1044 = vadd.f32 %v1042, %v1043
    %v1045 = vrot.slane %v1044, 4
    %v1046 = vadd.f32 %v1044, %v1045
    %v1047 = vrot.slane %v1046, 2
    %v1048 = vadd.f32 %v1046, %v1047
    %v1049 = vrot.slane %v1048, 1
    %v1050 = vadd.f32 %v1048, %v1049
    %v1051 = vsel %vm996, %v976, 0.0
    %v1052 = vsel %vm996, %v977, 0.0
    %v1053 = vadd.f32 %v1051, %v1052
    %v1054 = vrot.slane %v1053, 4
    %v1055 = vadd.f32 %v1053, %v1054
    %v1056 = vrot.slane %v1055, 2
    %v1057 = vadd.f32 %v1055, %v1056
    %v1058 = vrot.slane %v1057, 1
    %v1059 = vadd.f32 %v1057, %v1058
    %v1060 = vsel %vm996, %v978, 0.0
    %v1061 = vsel %vm996, %v979, 0.0
    %v1062 = vadd.f32 %v1060, %v1061
    %v1063 = vrot.slane %v1062, 4
    %v1064 = vadd.f32 %v1062, %v1063
    %v1065 = vrot.slane %v1064, 2
    %v1066 = vadd.f32 %v1064, %v1065
    %v1067 = vrot.slane %v1066, 1
    %v1068 = vadd.f32 %v1066, %v1067
    %v1069 = vsel %vm996, %v980, 0.0
    %v1070 = vsel %vm996, %v981, 0.0
    %v1071 = vadd.f32 %v1069, %v1070
    %v1072 = vrot.slane %v1071, 4
    %v1073 = vadd.f32 %v1071, %v1072
    %v1074 = vrot.slane %v1073, 2
    %v1075 = vadd.f32 %v1073, %v1074
    %v1076 = vrot.slane %v1075, 1
    %v1077 = vadd.f32 %v1075, %v1076
    %v1078 = vsel %vm996, %v982, 0.0
    %v1079 = vsel %vm996, %v983, 0.0
    %v1080 = vadd.f32 %v1078, %v1079
    %v1081 = vrot.slane %v1080, 4
    %v1082 = vadd.f32 %v1080, %v1081
    %v1083 = vrot.slane %v1082, 2
    %v1084 = vadd.f32 %v1082, %v1083
    %v1085 = vrot.slane %v1084, 1
    %v1086 = vadd.f32 %v1084, %v1085
    %v1087 = vsel %vm996, %v984, 0.0
    %v1088 = vsel %vm996, %v985, 0.0
    %v1089 = vadd.f32 %v1087, %v1088
    %v1090 = vrot.slane %v1089, 4
    %v1091 = vadd.f32 %v1089, %v1090
    %v1092 = vrot.slane %v1091, 2
    %v1093 = vadd.f32 %v1091, %v1092
    %v1094 = vrot.slane %v1093, 1
    %v1095 = vadd.f32 %v1093, %v1094
    %v1096 = vsel %vm996, %v986, 0.0
    %v1097 = vsel %vm996, %v987, 0.0
    %v1098 = vadd.f32 %v1096, %v1097
    %v1099 = vrot.slane %v1098, 4
    %v1100 = vadd.f32 %v1098, %v1099
    %v1101 = vrot.slane %v1100, 2
    %v1102 = vadd.f32 %v1100, %v1101
    %v1103 = vrot.slane %v1102, 1
    %v1104 = vadd.f32 %v1102, %v1103
    %v1105 = vsel %vm996, %v988, 0.0
    %v1106 = vsel %vm996, %v989, 0.0
    %v1107 = vadd.f32 %v1105, %v1106
    %v1108 = vrot.slane %v1107, 4
    %v1109 = vadd.f32 %v1107, %v1108
    %v1110 = vrot.slane %v1109, 2
    %v1111 = vadd.f32 %v1109, %v1110
    %v1112 = vrot.slane %v1111, 1
    %v1113 = vadd.f32 %v1111, %v1112
    %v1114 = vsel %vm996, %v990, 0.0
    %v1115 = vsel %vm996, %v991, 0.0
    %v1116 = vadd.f32 %v1114, %v1115
    %v1117 = vrot.slane %v1116, 4
    %v1118 = vadd.f32 %v1116, %v1117
    %v1119 = vrot.slane %v1118, 2
    %v1120 = vadd.f32 %v1118, %v1119
    %v1121 = vrot.slane %v1120, 1
    %v1122 = vadd.f32 %v1120, %v1121
    %v1123 = vsel %vm996, %v992, 0.0
    %v1124 = vsel %vm996, %v993, 0.0
    %v1125 = vadd.f32 %v1123, %v1124
    %v1126 = vrot.slane %v1125, 4
    %v1127 = vadd.f32 %v1125, %v1126
    %v1128 = vrot.slane %v1127, 2
    %v1129 = vadd.f32 %v1127, %v1128
    %v1130 = vrot.slane %v1129, 1
    %v1131 = vadd.f32 %v1129, %v1130
    %v1132 = vsel %vm996, %v994, 0.0
    %v1133 = vsel %vm996, %v995, 0.0
    %v1134 = vadd.f32 %v1132, %v1133
    %v1135 = vrot.slane %v1134, 4
    %v1136 = vadd.f32 %v1134, %v1135
    %v1137 = vrot.slane %v1136, 2
    %v1138 = vadd.f32 %v1136, %v1137
    %v1139 = vrot.slane %v1138, 1
    %v1140 = vadd.f32 %v1138, %v1139
    %v1141 = vld [vmem:[%s3] sm:$0xff]
    %v1142 = vld [vmem:[%s3 + $0x8] sm:$0xff]
    %v1143 = vld [vmem:[%s3 + $0x10] sm:$0xff]
    %v1144 = vld [vmem:[%s3 + $0x18] sm:$0xff]
    %v1145 = vld [vmem:[%s3 + $0x20] sm:$0xff]
    %v1146 = vld [vmem:[%s3 + $0x28] sm:$0xff]
    %v1147 = vld [vmem:[%s3 + $0x30] sm:$0xff]
    %v1148 = vld [vmem:[%s3 + $0x38] sm:$0xff]
    %v1149 = vld [vmem:[%s4] sm:$0x1]
    %v1151 = vlaneseq
    %v1152 = vshrl.u32 %v1151, 7
    %v1153 = vsub.s32 0, %v1152
    %v1154 = vrot.slane %v1149, %v1153
    %vm1172 = vcmask 1041409
    %v1173 = vsel %vm1172, %v1014, %v1005
    %vm1174 = vcmask 1042434
    %v1175 = vsel %vm1174, %v1023, %v1173
    %vm1176 = vcmask 1043459
    %v1177 = vsel %vm1176, %v1032, %v1175
    %vm1178 = vcmask 1044484
    %v1179 = vsel %vm1178, %v1041, %v1177
    %vm1180 = vcmask 1045509
    %v1181 = vsel %vm1180, %v1050, %v1179
    %vm1182 = vcmask 1046534
    %v1183 = vsel %vm1182, %v1059, %v1181
    %vm1184 = vcmask 1047559
    %v1185 = vsel %vm1184, %v1068, %v1183
    %v1186 = vsel %vm1172, %v1086, %v1077
    %v1187 = vsel %vm1174, %v1095, %v1186
    %v1188 = vsel %vm1176, %v1104, %v1187
    %v1189 = vsel %vm1178, %v1113, %v1188
    %v1190 = vsel %vm1180, %v1122, %v1189
    %v1191 = vsel %vm1182, %v1131, %v1190
    %v1192 = vsel %vm1184, %v1140, %v1191
    %1193 = vrot.lane.b32.xlu0 %v1185, 64
    %v1194 = vpop.permute.xlu0 %1193
    %1195 = vrot.lane.b32.xlu0 %v1192, 64
    %v1196 = vpop.permute.xlu0 %1195
    %vm1197 = vcmask 523264
    %v1198 = vsel %vm1197, %v1194, 0
    %v1200 = vsel %vm1197, %v1196, 0
    %1202 = vmatprep.subr.mxu0 0.0
    %1203 = vmatpush1.msra.mxu0 0.0
    %1204 = vmatprep.subr.mxu0 0.0
    %1205 = vmatpush1.msra.mxu0 0.0
    %1206 = vmatprep.subr.mxu0 0.0
    %1207 = vmatpush1.msra.mxu0 0.0
    %1208 = vmatprep.subr.mxu0 0.0
    %1209 = vmatpush1.msra.mxu0 0.0
    %1210 = vmatprep.subr.mxu0 0.0
    %1211 = vmatpush1.msra.mxu0 0.0
    %1212 = vmatprep.subr.mxu0 0.0
    %1213 = vmatpush1.msra.mxu0 0.0
    %1214 = vmatprep.subr.mxu0 0.0
    %1215 = vmatpush1.msra.mxu0 0.0
    %1216 = vmatprep.subr.mxu0 0.0
    %1217 = vmatpush1.msra.mxu0 0.0
    %1218 = vmatprep.subr.mxu0 0.0
    %1219 = vmatpush1.msra.mxu0 %v1148
    %1220 = vmatprep.subr.mxu0 0.0
    %1221 = vmatpush1.msra.mxu0 %v1147
    %1222 = vmatprep.subr.mxu0 0.0
    %1223 = vmatpush1.msra.mxu0 %v1146
    %1224 = vmatprep.subr.mxu0 0.0
    %1225 = vmatpush1.msra.mxu0 %v1145
    %1226 = vmatprep.subr.mxu0 0.0
    %1227 = vmatpush1.msra.mxu0 %v1144
    %1228 = vmatprep.subr.mxu0 0.0
    %1229 = vmatpush1.msra.mxu0 %v1143
    %1230 = vmatprep.subr.mxu0 0.0
    %1231 = vmatpush1.msra.mxu0 %v1142
    %1232 = vmatprep.subr.mxu0 0.0
    %1233 = vmatpush1.msra.mxu0 %v1141
    %1234 = vmatprep.subr.mxu0 0.0
    %1235 = vmatpush2.msra.mxu0 0.0
    %1236 = vmatprep.subr.mxu0 0.0
    %1237 = vmatpush2.msra.mxu0 0.0
    %1238 = vmatprep.subr.mxu0 0.0
    %1239 = vmatpush2.msra.mxu0 0.0
    %1240 = vmatprep.subr.mxu0 0.0
    %1241 = vmatpush2.msra.mxu0 0.0
    %1242 = vmatprep.subr.mxu0 0.0
    %1243 = vmatpush2.msra.mxu0 0.0
    %1244 = vmatprep.subr.mxu0 0.0
    %1245 = vmatpush2.msra.mxu0 0.0
    %1246 = vmatprep.subr.mxu0 0.0
    %1247 = vmatpush2.msra.mxu0 0.0
    %1248 = vmatprep.subr.mxu0 0.0
    %1249 = vmatpush2.msra.mxu0 0.0
    %1250 = vmatprep.subr.mxu0 0.0
    %1251 = vmatpush2.msra.mxu0 0.0
    %1252 = vmatprep.subr.mxu0 0.0
    %1253 = vmatpush2.msra.mxu0 0.0
    %1254 = vmatprep.subr.mxu0 0.0
    %1255 = vmatpush2.msra.mxu0 0.0
    %1256 = vmatprep.subr.mxu0 0.0
    %1257 = vmatpush2.msra.mxu0 0.0
    %1258 = vmatprep.subr.mxu0 0.0
    %1259 = vmatpush2.msra.mxu0 0.0
    %1260 = vmatprep.subr.mxu0 0.0
    %1261 = vmatpush2.msra.mxu0 0.0
    %1262 = vmatprep.subr.mxu0 0.0
    %1263 = vmatpush2.msra.mxu0 0.0
    %1264 = vmatprep.subr.mxu0 0.0
    %1265 = vmatpush2.msra.mxu0 0.0
    %1266 = vmatprep.mubr.f32.mxu0 0.0
    %1267 = vmatmul.mubr.f32.gmra.mxu0 %v1198
    %v1268 = vpop.f32.mrf.mxu0
    %v1269 = vadd.f32 %v1154, %v1268
    %v1270 = vpop.f32.mrf.mxu0
    %1271 = vmatprep.mubr.f32.mxu0 0.0
    %1272 = vmatmul.mubr.f32.gmra.mxu0 %v1200
    %v1273 = vpop.f32.mrf.mxu0
    %v1274 = vadd.f32 %v1154, %v1273
    %v1275 = vpop.f32.mrf.mxu0
    %1276 = vdwg.mxu0
    %1277 = vst [vmem:[#allocation2] sm:$0xff] %v1269
    %1278 = vst [vmem:[#allocation2 + $0x8] sm:$0xff] %v1274
    // Predicated region
    $region22: #{tpu_custom_call.1} parent=1 // pred_check
      _
    $region23: #{tpu_custom_call.1} parent=1 // pred_check_branch
      %1280 = sbr.rel (0) target = $region25
    $region24: #{tpu_custom_call.1} parent=1 // pred_region
      %s1282 = ssub.s32 256, 256
      %1283 = vsyncadd [#allocation3], %s1282
      %s1284 = sshll.u32 [#allocation2], 4
      %s1285 = int_to_ptr.vmem [resolvable:$true] %s1284
      %1290 = dma.vmem_to_hbm [thread:$0]  %s1285, 256, %s5, [#allocation3], 128, 128, 8
    $region25: #{tpu_custom_call.1} parent=1 // pred_fallthru
      _
    // Predicated region
    $region26: #{tpu_custom_call.1} parent=1 // pred_check
      _
    $region27: #{tpu_custom_call.1} parent=1 // pred_check_branch
      %1292 = sbr.rel (0) target = $region29
    $region28: #{tpu_custom_call.1} parent=1 // pred_region
      %1293 = dma.done [#allocation3], 256
    $region29: #{tpu_custom_call.1} parent=1 // pred_fallthru
      _
    %1294 = vsyncpa [#allocation3], 1

</llo_original>
